<compile_context>
chip_gen: v7x
topology: tpu7x:2x2x1
jax: 0.10.0
libtpu: 0.0.40
codegen_flags: <defaults>
</compile_context>

<pallas_src>
import functools

import jax
import jax.numpy as jnp
from jax.experimental import pallas as pl
from jax.experimental.pallas import tpu as pltpu


def _round_up(n, m):
    return ((n + m - 1) // m) * m


def _device_vmem_bytes():
    """Physical VMEM per TensorCore, with a conservative fallback."""
    try:
        return int(pltpu.get_tpu_info().vmem_capacity_bytes)
    except Exception:
        return 64 * 1024 * 1024   # v7x-safe lower bound


def _block_spec(shape, index_map, *, buffer_count=None):
    """BlockSpec with optional N-buffering; falls back if the arg is absent."""
    if buffer_count is not None:
        try:
            return pl.BlockSpec(shape, index_map,
                                pipeline_mode=pl.Buffered(buffer_count))
        except (TypeError, AttributeError):
            pass
    return pl.BlockSpec(shape, index_map)


def generator_kernel(x_ref, wt_ref, b_ref, o_ref):
    """One row-tile of log_softmax(x @ Wt + b)."""
    # Canonical (M,K)x(K,N) matmul: contract last axis of x with first of Wt.
    logits = jax.lax.dot_general(
        x_ref[...], wt_ref[...],
        dimension_numbers=(((1,), (0,)), ((), ())),
        preferred_element_type=jnp.float32,
    ) + b_ref[...]                                    # (Tr, V) f32

    m = jnp.max(logits, axis=-1, keepdims=True)       # XLU row-reduce

    if o_ref.dtype == jnp.float32:
        # Stage shifted logits in o_ref, fix up in place: only one live
        # (Tr, V) f32 temporary besides the output buffer.
        o_ref[...] = logits - m
        lse = jnp.log(jnp.sum(jnp.exp(o_ref[...]), axis=-1, keepdims=True))
        o_ref[...] = o_ref[...] - lse
    else:
        shifted = logits - m
        lse = jnp.log(jnp.sum(jnp.exp(shifted), axis=-1, keepdims=True))
        o_ref[...] = (shifted - lse).astype(o_ref.dtype)


def generator(x, weight, bias, *, tile_rows=256, use_bf16=True,
              out_dtype=jnp.float32):
    """log_softmax(x @ weight.T + bias, axis=-1) — matches nn.Linear + log_softmax.

    Args:
      x:      (..., d_model)
      weight: (vocab_size, d_model)  -- torch nn.Linear layout
              (pass a cached bf16 weight to avoid the per-call cast)
      bias:   (vocab_size,)
    Returns:
      (..., vocab_size) in `out_dtype` (f32 default, matching torch).
    """
    *lead, d_model = x.shape
    vocab, d2 = weight.shape
    assert d2 == d_model, "weight must be (vocab_size, d_model)"

    mm_dtype = jnp.bfloat16 if use_bf16 else jnp.float32
    isz = jnp.dtype(mm_dtype).itemsize
    row_align = 16 if mm_dtype == jnp.bfloat16 else 8   # bf16 packs 16 rows/vreg

    # --- operand preparation (cast only when needed; transpose W once) ------
    x2 = x.reshape(-1, d_model)
    if x2.dtype != mm_dtype:
        x2 = x2.astype(mm_dtype)
    wt = weight.T                                       # (d_model, vocab)
    if wt.dtype != mm_dtype:
        wt = wt.astype(mm_dtype)
    b = bias.reshape(1, vocab).astype(jnp.float32)

    n_rows = x2.shape[0]
    rows_aligned = _round_up(n_rows, row_align)

    # --- derive the row-tile from the VMEM budget ---------------------------
    device_vmem = _device_vmem_bytes()
    resident_bytes = d_model * vocab * isz + vocab * 4      # W + bias (1-buffered)
    budget = int(0.85 * device_vmem) - resident_bytes - (1 << 20)
    # per-row: 2x double-buffered x tile + 2x f32 output + ~2x f32 temporaries
    per_row = 2 * d_model * isz + 2 * vocab * jnp.dtype(out_dtype).itemsize \
        + 2 * vocab * 4
    if budget > per_row * row_align:
        tr_budget = (budget // per_row) // row_align * row_align
    else:
        # TODO(synk): switch to the vocab-tiled online-LSE path here.
        tr_budget = row_align

    tr = max(row_align, min(tile_rows, tr_budget, rows_aligned))
    # Keep >= 2 grid steps when possible so the "parallel" axis can use both
    # TensorCores on v7x (per-step overhead is only ~0.35 us).
    if rows_aligned >= 2 * row_align:
        half_rows = _round_up((rows_aligned + 1) // 2, row_align)
        tr = min(tr, half_rows)

    n_pad = _round_up(n_rows, tr)
    if n_pad != n_rows:
        x2 = jnp.pad(x2, ((0, n_pad - n_rows), (0, 0)))

    grid = (n_pad // tr,)
    in_specs = [
        _block_spec((tr, d_model), lambda i: (i, 0)),                    # x tile
        _block_spec((d_model, vocab), lambda i: (0, 0), buffer_count=1),  # W^T
        _block_spec((1, vocab), lambda i: (0, 0), buffer_count=1),        # bias
    ]
    out_specs = pl.BlockSpec((tr, vocab), lambda i: (i, 0))

    # --- VMEM limit: full footprint incl. f32 temporaries, clamped to device.
    footprint = (2 * tr * d_model * isz                         # x (2 bufs)
                 + d_model * vocab * isz + vocab * 4            # W + bias (1 buf)
                 + 2 * tr * vocab * jnp.dtype(out_dtype).itemsize  # out (2 bufs)
                 + 2 * tr * vocab * 4)                          # f32 temps
    vmem_limit = int(min(device_vmem,
                         max(int(1.25 * footprint), 16 * 1024 * 1024)))

    out = pl.pallas_call(
        generator_kernel,
        out_shape=jax.ShapeDtypeStruct((n_pad, vocab), out_dtype),
        grid=grid,
        in_specs=in_specs,
        out_specs=out_specs,
        compiler_params=pltpu.CompilerParams(
            dimension_semantics=("parallel",),
            vmem_limit_bytes=vmem_limit,
        ),
    )(x2, wt, b)

    out = out[:n_rows]
    return out.reshape(*lead, vocab)


if __name__ == "__main__":
    # Small shapes consistent with the module: batch=2, seq=8, d_model=32,
    # vocab_size=128 (multiple of 128 -> lane-dense weight/output).
    B, S, D, V = 2, 8, 32, 128

    key = jax.random.PRNGKey(0)
    kx, kw, kb = jax.random.split(key, 3)
    x = jax.random.normal(kx, (B, S, D), jnp.float32)
    weight = jax.random.normal(kw, (V, D), jnp.float32) * (D ** -0.5)
    bias = jax.random.normal(kb, (V,), jnp.float32) * 0.01

    out = generator(x, weight, bias, tile_rows=256, use_bf16=True)
    out = jax.block_until_ready(out)

    assert out.shape == (B, S, V)
    assert bool(jnp.all(jnp.isfinite(out)))

    # log_softmax rows must exp-sum to 1 (structural property, f32 math).
    probs_sum = jnp.sum(jnp.exp(out), axis=-1)
    assert bool(jnp.allclose(probs_sum, 1.0, atol=1e-3))

    # Compare against a pure-JAX f32 reference (loose tol: bf16 MXU inputs).
    ref = jax.nn.log_softmax(
        jnp.einsum("bsd,vd->bsv", x, weight) + bias, axis=-1)
    assert bool(jnp.allclose(out, ref, atol=5e-2))

    print("KERNEL_OK")
</pallas_src>

<mosaic_0001>
module attributes {stable_mosaic.version = 11 : i64} {
  func.func @generator_kernel(%arg0: i32, %arg1: memref<16x32xbf16, #tpu.memory_space<vmem>>, %arg2: memref<32x128xbf16, #tpu.memory_space<vmem>>, %arg3: memref<1x128xf32, #tpu.memory_space<vmem>>, %arg4: memref<16x128xf32, #tpu.memory_space<vmem>>) attributes {dimension_semantics = [#tpu.dimension_semantics<parallel>], iteration_bounds = array<i64: 1>, scalar_prefetch = 0 : i64, scratch_operands = 0 : i64, tpu.core_type = #tpu.core_type<tc>, window_params = [{transform_indices = @transform_0, window_bounds = array<i64: 16, 32>}, {pipeline_mode = #tpu.pipeline_mode<synchronous>, transform_indices = @transform_1, window_bounds = array<i64: 32, 128>}, {pipeline_mode = #tpu.pipeline_mode<synchronous>, transform_indices = @transform_2, window_bounds = array<i64: 1, 128>}, {transform_indices = @transform_3, window_bounds = array<i64: 16, 128>}]} {
    %c0 = arith.constant 0 : index
    %c0_0 = arith.constant 0 : index
    %0 = vector.load %arg1[%c0, %c0_0] : memref<16x32xbf16, #tpu.memory_space<vmem>>, vector<16x32xbf16>
    %c0_1 = arith.constant 0 : index
    %c0_2 = arith.constant 0 : index
    %1 = vector.load %arg2[%c0_1, %c0_2] : memref<32x128xbf16, #tpu.memory_space<vmem>>, vector<32x128xbf16>
    %cst = arith.constant dense<0.000000e+00> : vector<16x128xf32>
    %2 = tpu.matmul %0, %1, %cst {dimension_numbers = #tpu.dot_dimension_numbers<[1], [0], [0], [1], [0, 0, 1, 1], [], []>} : vector<16x32xbf16>, vector<32x128xbf16>, vector<16x128xf32> -> vector<16x128xf32>
    %c0_3 = arith.constant 0 : index
    %c0_4 = arith.constant 0 : index
    %3 = vector.load %arg3[%c0_3, %c0_4] : memref<1x128xf32, #tpu.memory_space<vmem>>, vector<1x128xf32>
    %4 = vector.broadcast %3 : vector<1x128xf32> to vector<16x128xf32>
    %5 = arith.addf %2, %4 : vector<16x128xf32>
    %cst_5 = arith.constant dense<0xFF800000> : vector<16xf32>
    %6 = vector.multi_reduction <maximumf>, %5, %cst_5 [1] : vector<16x128xf32> to vector<16xf32>
    %7 = vector.shape_cast %6 : vector<16xf32> to vector<16x1xf32>
    %8 = vector.broadcast %7 : vector<16x1xf32> to vector<16x128xf32>
    %9 = arith.subf %5, %8 : vector<16x128xf32>
    %c0_6 = arith.constant 0 : index
    %c0_7 = arith.constant 0 : index
    %10 = vector.load %arg4[%c0_6, %c0_7] : memref<16x128xf32, #tpu.memory_space<vmem>>, vector<16x128xf32>
    tpu.vector_store %arg4[%c0_6, %c0_7], %9 {strides = array<i32>} : memref<16x128xf32, #tpu.memory_space<vmem>>, vector<16x128xf32>,
    %c0_8 = arith.constant 0 : index
    %c0_9 = arith.constant 0 : index
    %11 = vector.load %arg4[%c0_8, %c0_9] : memref<16x128xf32, #tpu.memory_space<vmem>>, vector<16x128xf32>
    %12 = math.exp %11 : vector<16x128xf32>
    %cst_10 = arith.constant dense<0.000000e+00> : vector<16xf32>
    %13 = vector.multi_reduction <add>, %12, %cst_10 [1] : vector<16x128xf32> to vector<16xf32>
    %14 = vector.shape_cast %13 : vector<16xf32> to vector<16x1xf32>
    %15 = math.log %14 : vector<16x1xf32>
    %c0_11 = arith.constant 0 : index
    %c0_12 = arith.constant 0 : index
    %16 = vector.load %arg4[%c0_11, %c0_12] : memref<16x128xf32, #tpu.memory_space<vmem>>, vector<16x128xf32>
    %17 = vector.broadcast %15 : vector<16x1xf32> to vector<16x128xf32>
    %18 = arith.subf %16, %17 : vector<16x128xf32>
    %c0_13 = arith.constant 0 : index
    %c0_14 = arith.constant 0 : index
    %19 = vector.load %arg4[%c0_13, %c0_14] : memref<16x128xf32, #tpu.memory_space<vmem>>, vector<16x128xf32>
    tpu.vector_store %arg4[%c0_13, %c0_14], %18 {strides = array<i32>} : memref<16x128xf32, #tpu.memory_space<vmem>>, vector<16x128xf32>,
    return
  }
  func.func @transform_0(%arg0: i32) -> (i32, i32) {
    %c0_i32 = arith.constant 0 : i32
    %c0_i32_0 = arith.constant 0 : i32
    return %arg0, %c0_i32 : i32, i32
  }
  func.func @transform_1(%arg0: i32) -> (i32, i32) {
    %c0_i32 = arith.constant 0 : i32
    %c0_i32_0 = arith.constant 0 : i32
    %c0_i32_1 = arith.constant 0 : i32
    return %c0_i32, %c0_i32_0 : i32, i32
  }
  func.func @transform_2(%arg0: i32) -> (i32, i32) {
    %c0_i32 = arith.constant 0 : i32
    %c0_i32_0 = arith.constant 0 : i32
    %c0_i32_1 = arith.constant 0 : i32
    return %c0_i32, %c0_i32_0 : i32, i32
  }
  func.func @transform_3(%arg0: i32) -> (i32, i32) {
    %c0_i32 = arith.constant 0 : i32
    %c0_i32_0 = arith.constant 0 : i32
    return %arg0, %c0_i32 : i32, i32
  }
}

</mosaic_0001>

<llo_original>
// kernel: tpu_custom_call.1
$region0: #{tpu_custom_call.1}
  #allocation0 [shape = 'u32[]', space=smem, size = 0x4, offset = 0x4, fixed_abs, tag = 'smem constant byte address 0x4 - core index']
  #allocation1 [shape = 'u32[144,128]{1,0:T(1,128)}', space=vmem, size = 0x12000, scoped, tag = 'internal scratch']
  %s0 = inlined_call_operand.hbm [shape: bf16[16,32], index: 0, kind: input, shape index: {}]
  %s1 = inlined_call_operand.hbm [shape: bf16[32,128], index: 1, kind: input, shape index: {}]
  %s2 = inlined_call_operand.vmem [shape: f32[1,128], index: 2, kind: input, shape index: {}]
  %s3 = inlined_call_operand.hbm [shape: f32[16,128], index: 3, kind: output, shape index: {}]
  %s4 = sld [smem:[#allocation0]]
  $region30: #{tpu_custom_call.1} parent=0
    _
  %s6 = ssub.s32 1, %s4
  %s7 = scalar_select 0, %s6, %s4
  $region1: #{tpu_custom_call.1} parent=0
    #allocation2 [shape = 'u8[4096]{0}', space=vmem, size = 0x1000, scoped, tag = 'input window, operand 0, single buffered']
    #allocation3 [shape = 's32[1]{0}', space=sflag, size = 0x4, scoped, tag = 'scoped memory for tpu_custom_call.1']
    #allocation4 [shape = 's32[1]{0}', space=sflag, size = 0x4, scoped, tag = 'scoped memory for tpu_custom_call.1']
    #allocation5 [shape = 'u8[8192]{0}', space=vmem, size = 0x2000, scoped, tag = 'input window, operand 1, single buffered']
    #allocation6 [shape = 's32[1]{0}', space=sflag, size = 0x4, scoped, tag = 'scoped memory for tpu_custom_call.1']
    #allocation7 [shape = 'u8[8192]{0}', space=vmem, size = 0x2000, scoped, tag = 'output window, operand 0, single buffered']
    %8 = vsyncpa [#allocation3], 0
    %9 = vsyncpa [#allocation6], 0
    %10 = vsyncpa [#allocation4], 0
    // Predicated region
    $region2: #{tpu_custom_call.1} parent=1 // pred_check
      _
    $region3: #{tpu_custom_call.1} parent=1 // pred_check_branch
      %12 = sbr.rel (0) target = $region5
    $region4: #{tpu_custom_call.1} parent=1 // pred_region
      %s14 = ssub.s32 128, 128
      %15 = vsyncadd [#allocation3], %s14
      %s16 = sshll.u32 [#allocation2], 4
      %s17 = int_to_ptr.vmem [resolvable:$true] %s16
      %22 = dma.hbm_to_vmem [thread:$0]  %s0, 128, %s17, [#allocation3], 64, 64, 4
    $region5: #{tpu_custom_call.1} parent=1 // pred_fallthru
      _
    // Predicated region
    $region6: #{tpu_custom_call.1} parent=1 // pred_check
      _
    $region7: #{tpu_custom_call.1} parent=1 // pred_check_branch
      %24 = sbr.rel (0) target = $region9
    $region8: #{tpu_custom_call.1} parent=1 // pred_region
      %s26 = ssub.s32 256, 256
      %27 = vsyncadd [#allocation6], %s26
      %s28 = sshll.u32 [#allocation5], 4
      %s29 = int_to_ptr.vmem [resolvable:$true] %s28
      %34 = dma.hbm_to_vmem [thread:$0]  %s1, 256, %s29, [#allocation6], 64, 64, 4
    $region9: #{tpu_custom_call.1} parent=1 // pred_fallthru
      _
    // Predicated region
    $region10: #{tpu_custom_call.1} parent=1 // pred_check
      _
    $region11: #{tpu_custom_call.1} parent=1 // pred_check_branch
      %36 = sbr.rel (0) target = $region13
    $region12: #{tpu_custom_call.1} parent=1 // pred_region
      _
    $region13: #{tpu_custom_call.1} parent=1 // pred_fallthru
      _
    // Predicated region
    $region14: #{tpu_custom_call.1} parent=1 // pred_check
      _
    $region15: #{tpu_custom_call.1} parent=1 // pred_check_branch
      %38 = sbr.rel (0) target = $region17
    $region16: #{tpu_custom_call.1} parent=1 // pred_region
      %39 = dma.done [#allocation3], 128
    $region17: #{tpu_custom_call.1} parent=1 // pred_fallthru
      _
    // Predicated region
    $region18: #{tpu_custom_call.1} parent=1 // pred_check
      _
    $region19: #{tpu_custom_call.1} parent=1 // pred_check_branch
      %41 = sbr.rel (0) target = $region21
    $region20: #{tpu_custom_call.1} parent=1 // pred_region
      %42 = dma.done [#allocation6], 256
    $region21: #{tpu_custom_call.1} parent=1 // pred_fallthru
      _
    %v44 = vld [vmem:[#allocation2] sm:$0xf]
    %v45 = vld [vmem:[#allocation2 + $0x4] sm:$0xf]
    %v46 = vld [vmem:[#allocation5] sm:$0xf]
    %v47 = vld [vmem:[#allocation5 + $0x4] sm:$0xf]
    %v48 = vld [vmem:[#allocation5 + $0x8] sm:$0xf]
    %v49 = vld [vmem:[#allocation5 + $0xc] sm:$0xf]
    %v50 = vld [vmem:[%s2] sm:$0x1]
    %v52 = vlaneseq
    %v53 = vshrl.u32 %v52, 7
    %v54 = vsub.s32 0, %v53
    %v55 = vrot.slane %v50, %v54
    %v59 = vunpack.c.l.b16 %v44
    %v60 = vunpack.c.l.b16 %v45
    %v61 = vpack.c.b16 %v60, %v59
    %v66 = vunpack.c.l.b16 %v46
    %v67 = vunpack.c.l.b16 %v47
    %v68 = vunpack.c.l.b16 %v48
    %v69 = vunpack.c.l.b16 %v49
    %v70 = vpack.c.b16 %v67, %v66
    %v71 = vpack.c.b16 %v69, %v68
    %vm74 = vcmask 261120
    %v76 = vsel %vm74, %v61, 0
    %78 = vmatprep.subr.bf16.mxu0 0
    %79 = vmatpush1.bf16.msra.mxu0 %v70
    %80 = vmatprep.subr.bf16.mxu0 0
    %81 = vmatpush1.bf16.msra.mxu0 %v71
    %82 = vmatprep.subr.bf16.mxu0 0
    %83 = vmatpush1.bf16.msra.mxu0 0
    %84 = vmatprep.subr.bf16.mxu0 0
    %85 = vmatpush1.bf16.msra.mxu0 0
    %86 = vmatprep.subr.bf16.mxu0 0
    %87 = vmatpush1.bf16.msra.mxu0 0
    %88 = vmatprep.subr.bf16.mxu0 0
    %89 = vmatpush1.bf16.msra.mxu0 0
    %90 = vmatprep.subr.bf16.mxu0 0
    %91 = vmatpush1.bf16.msra.mxu0 0
    %92 = vmatprep.subr.bf16.mxu0 0
    %93 = vmatpush1.bf16.msra.mxu0 0
    %94 = vmatprep.subr.bf16.mxu0 0
    %95 = vmatpush1.bf16.msra.mxu0 0
    %96 = vmatprep.subr.bf16.mxu0 0
    %97 = vmatpush1.bf16.msra.mxu0 0
    %98 = vmatprep.subr.bf16.mxu0 0
    %99 = vmatpush1.bf16.msra.mxu0 0
    %100 = vmatprep.subr.bf16.mxu0 0
    %101 = vmatpush1.bf16.msra.mxu0 0
    %102 = vmatprep.subr.bf16.mxu0 0
    %103 = vmatpush1.bf16.msra.mxu0 0
    %104 = vmatprep.subr.bf16.mxu0 0
    %105 = vmatpush1.bf16.msra.mxu0 0
    %106 = vmatprep.subr.bf16.mxu0 0
    %107 = vmatpush1.bf16.msra.mxu0 0
    %108 = vmatprep.subr.bf16.mxu0 0
    %109 = vmatpush1.bf16.msra.mxu0 0
    %110 = vmatprep.mubr.bf16.mxu0 0
    %111 = vmatmul.mubr.bf16.gmra.mrb[0].mxu0 %v76
    %v112 = vpop.f32.mrb[0].mxu0
    %v113 = vadd.f32 %v55, %v112
    %v114 = vpop.f32.mrb[0].mxu0
    %v115 = vpop.f32.mrb[0].mxu0
    %v116 = vadd.f32 %v55, %v115
    %v117 = vpop.f32.mrb[0].mxu0
    %118 = vdwg.mxu0
    %119 = vmax.xlane.f32.xlu0 %v113
    %v120 = vpop.xlane.xlu0 %119
    %121 = vmax.xlane.f32.xlu0 %v116
    %v122 = vpop.xlane.xlu0 %121
    %v123 = vsub.f32 %v113, %v120
    %v124 = vsub.f32 %v116, %v122
    %125 = vst [vmem:[#allocation7] sm:$0xff] %v123
    %126 = vst [vmem:[#allocation7 + $0x8] sm:$0xff] %v124
    %v127 = vld [vmem:[#allocation7] sm:$0xff]
    %v128 = vld [vmem:[#allocation7 + $0x8] sm:$0xff]
    %v129 = vmul.f32 %v127, 1.442695
    %v130 = vpow.pop %v129
    %v131 = vmul.f32 %v128, 1.442695
    %v132 = vpow.pop %v131
    %133 = vadd.xlane.f32.xlu0 %v130
    %v134 = vpop.xlane.xlu0 %133
    %135 = vadd.xlane.f32.xlu0 %v132
    %v136 = vpop.xlane.xlu0 %135
    %v137 = vlog2.pop %v134
    %v138 = vmul.f32 %v137, 0.6931472
    %v139 = vlog2.pop %v136
    %v140 = vmul.f32 %v139, 0.6931472
    %v141 = vsub.f32 %v127, %v138
    %v142 = vsub.f32 %v128, %v140
    %143 = vst [vmem:[#allocation7] sm:$0xff] %v141
    %144 = vst [vmem:[#allocation7 + $0x8] sm:$0xff] %v142
    // Predicated region
    $region22: #{tpu_custom_call.1} parent=1 // pred_check
      _
    $region23: #{tpu_custom_call.1} parent=1 // pred_check_branch
      %146 = sbr.rel (0) target = $region25
    $region24: #{tpu_custom_call.1} parent=1 // pred_region
      %s148 = ssub.s32 256, 256
      %149 = vsyncadd [#allocation4], %s148
      %s150 = sshll.u32 [#allocation7], 4
      %s151 = int_to_ptr.vmem [resolvable:$true] %s150
      %156 = dma.vmem_to_hbm [thread:$0]  %s151, 256, %s3, [#allocation4], 128, 128, 8
    $region25: #{tpu_custom_call.1} parent=1 // pred_fallthru
      _
    // Predicated region
    $region26: #{tpu_custom_call.1} parent=1 // pred_check
      _
    $region27: #{tpu_custom_call.1} parent=1 // pred_check_branch
      %158 = sbr.rel (0) target = $region29
    $region28: #{tpu_custom_call.1} parent=1 // pred_region
      %159 = dma.done [#allocation4], 256
    $region29: #{tpu_custom_call.1} parent=1 // pred_fallthru
      _
    %160 = vsyncpa [#allocation3], 1
    %161 = vsyncpa [#allocation6], 1
    %162 = vsyncpa [#allocation4], 1

</llo_original>
